<compile_context>
chip_gen: v5e
topology: v5e:2x2
jax: 0.10.0
libtpu: 0.0.40
codegen_flags: <defaults>
</compile_context>

<pallas_src>
import functools

import jax
import jax.numpy as jnp
from jax import lax
from jax.experimental import pallas as pl
from jax.experimental.pallas import tpu as pltpu

_NEG_BIG = -1e30  # large-negative mask value (avoids -inf arithmetic hazards)


def _flash_fwd_kernel(q_ref, k_ref, v_ref, o_ref, q_sc, m_sc, l_sc, acc_sc, *,
                      scale, len_k, kv_tile, need_kv_mask, compute_dtype,
                      approx_reciprocal):
    kv = pl.program_id(2)
    last_kv = pl.num_programs(2) - 1

    @pl.when(kv == 0)
    def _init():
        # Fold the scale into Q once per q-tile (applied in f32, then cast to
        # the MXU feed dtype) instead of re-scaling / re-casting every kv step.
        q = q_ref[0].astype(jnp.float32)
        if scale is not None:
            q = q * scale
        q_sc[...] = q.astype(compute_dtype)
        m_sc[...] = jnp.full_like(m_sc, -jnp.inf)
        l_sc[...] = jnp.zeros_like(l_sc)
        acc_sc[...] = jnp.zeros_like(acc_sc)

    k = k_ref[0].astype(compute_dtype)   # (tkv, d)
    v = v_ref[0].astype(compute_dtype)   # (tkv, dv)

    # Q @ K^T without materializing K^T: contract the feature axes.
    # bf16 feeds (for f32 callers) with f32 accumulation on the MXU.
    s = lax.dot_general(q_sc[...], k,
                        dimension_numbers=(((1,), (1,)), ((), ())),
                        preferred_element_type=jnp.float32)   # (tq, tkv) f32

    def _update(scores):
        # Online softmax update (f32 running max / sum / accumulator).
        m_prev = m_sc[...]
        m_new = jnp.maximum(m_prev, jnp.max(scores, axis=-1, keepdims=True))
        alpha = jnp.exp(m_prev - m_new)
        p = jnp.exp(scores - m_new)
        l_sc[...] = alpha * l_sc[...] + jnp.sum(p, axis=-1, keepdims=True)
        acc_sc[...] = alpha * acc_sc[...] + jnp.dot(
            p.astype(compute_dtype), v, preferred_element_type=jnp.float32)
        m_sc[...] = m_new

    if need_kv_mask:
        # Only the last kv tile contains zero-padded positions: gate the
        # iota/compare/select VALU work to that single tile.
        @pl.when(kv == last_kv)
        def _masked():
            kv_ids = kv * kv_tile + lax.broadcasted_iota(jnp.int32, s.shape, 1)
            _update(jnp.where(kv_ids < len_k, s, _NEG_BIG))

        @pl.when(kv != last_kv)
        def _unmasked():
            _update(s)
    else:
        _update(s)

    @pl.when(kv == last_kv)
    def _finalize():
        if approx_reciprocal:
            o_ref[0] = (acc_sc[...] *
                        pl.reciprocal(l_sc[...], approx=True)).astype(o_ref.dtype)
        else:
            o_ref[0] = (acc_sc[...] / l_sc[...]).astype(o_ref.dtype)


def _round_up(x, m):
    return ((x + m - 1) // m) * m


def _cdiv(a, b):
    return -(-a // b)


def _choose_tile(n, preferred, sub):
    # Long sequences use the preferred flash tile; short ones use the whole
    # (sublane-aligned) length so tiny inputs are not padded up to the tile.
    preferred = _round_up(preferred, sub)
    return preferred if n >= preferred else _round_up(max(n, 1), sub)


def _auto_kv_buffer_depth():
    # v5e: per-step K/V DMA time rivals MXU time at depth 2 -> use depth 3.
    try:
        kind = jax.devices()[0].device_kind.lower()
    except Exception:
        return None
    if "v5 lite" in kind or "v5e" in kind:
        return 3
    return None


def _block_spec(shape, index_map, buffer_depth=None):
    if buffer_depth is not None and buffer_depth != 2:
        try:
            return pl.BlockSpec(shape, index_map,
                                pipeline_mode=pl.Buffered(buffer_depth))
        except Exception:
            pass  # jax without pipeline_mode support: default double-buffering
    return pl.BlockSpec(shape, index_map)


def scaled_dot_product_attention(Q, K, V, scale=None, *, q_tile=512,
                                 kv_tile=1024, float32_mxu_bf16=True,
                                 approx_reciprocal=True,
                                 kv_buffer_depth="auto"):
    """Pallas TPU ScaledDotProductAttention.forward.

    Q: [B, len_Q, dim]; K: [B, len_K, dim]; V: [B, len_K, dim_V]
    Returns context: [B, len_Q, dim_V]  (the PyTorch forward returns only
    `context`).
    """
    B, len_q, dim_q = Q.shape
    Bk, len_k, dim_k = K.shape
    Bv, len_v, dim_v = V.shape
    assert dim_q == dim_k, "Q and K feature dims must match"
    assert len_k == len_v, "K and V sequence lengths must match"
    assert B == Bk == Bv, "batch dims must match"

    # PyTorch gates on truthiness (`if scale:`): None and 0.0 both skip.
    scale_val = float(scale) if scale else None

    in_dtype = jnp.dtype(Q.dtype)
    compute_dtype = (jnp.bfloat16
                     if (float32_mxu_bf16 and in_dtype == jnp.float32)
                     else Q.dtype)

    # Sublane multiple for the packed dtype (8 for f32, 16 bf16, 32 int8/fp8).
    sub = max(8, 32 // in_dtype.itemsize)

    tq = _choose_tile(len_q, q_tile, sub)
    tkv = _choose_tile(len_k, kv_tile, sub)

    # Megacore balance (v7x has 2 TensorCores splitting the parallel axes):
    # keep at least two parallel (b, qi) tiles when batch == 1 and tq is big.
    if B == 1 and _cdiv(len_q, tq) < 2 and tq >= 256:
        tq = _round_up(_cdiv(len_q, 2), sub)

    lqp = _round_up(len_q, tq)
    lkp = _round_up(len_k, tkv)

    # Feature dims stay unpadded (block last dim == full array dim is legal for
    # any size); only sequence lengths are padded to tile multiples.
    qp = Q if lqp == len_q else jnp.pad(Q, ((0, 0), (0, lqp - len_q), (0, 0)))
    kp = K if lkp == len_k else jnp.pad(K, ((0, 0), (0, lkp - len_k), (0, 0)))
    vp = V if lkp == len_k else jnp.pad(V, ((0, 0), (0, lkp - len_k), (0, 0)))

    n_q = lqp // tq
    n_kv = lkp // tkv
    need_kv_mask = lkp != len_k

    if kv_buffer_depth == "auto":
        kv_buffer_depth = _auto_kv_buffer_depth()

    kernel = functools.partial(
        _flash_fwd_kernel, scale=scale_val, len_k=len_k, kv_tile=tkv,
        need_kv_mask=need_kv_mask, compute_dtype=compute_dtype,
        approx_reciprocal=approx_reciprocal)

    # Explicit VMEM budget: double-buffered Q/K/V/O blocks + scratch + f32
    # score/prob temporaries. Matters on v7x (64 MiB physical VMEM).
    itemsize = in_dtype.itemsize
    c_itemsize = jnp.dtype(compute_dtype).itemsize
    blocks = 2 * itemsize * (tq * dim_q + tkv * dim_q + tkv * dim_v + tq * dim_v)
    scratch = c_itemsize * tq * dim_q + 4 * (2 * tq + tq * dim_v)
    temps = 4 * 2 * tq * tkv + c_itemsize * tq * tkv
    vmem_limit = int(min(48 * 2**20,
                         max(32 * 2**20, 2 * (blocks + scratch + temps))))

    cost = pl.CostEstimate(
        flops=2 * B * len_q * len_k * (dim_q + dim_v),
        transcendentals=B * len_q * len_k,
        bytes_accessed=itemsize * (Q.size + n_q * (K.size + V.size)
                                   + B * len_q * dim_v),
    )

    out_padded = pl.pallas_call(
        kernel,
        out_shape=jax.ShapeDtypeStruct((B, lqp, dim_v), Q.dtype),
        grid_spec=pltpu.PrefetchScalarGridSpec(
            num_scalar_prefetch=0,
            grid=(B, n_q, n_kv),
            in_specs=[
                pl.BlockSpec((1, tq, dim_q), lambda b, qi, ki: (b, qi, 0)),
                _block_spec((1, tkv, dim_q), lambda b, qi, ki: (b, ki, 0),
                            kv_buffer_depth),
                _block_spec((1, tkv, dim_v), lambda b, qi, ki: (b, ki, 0),
                            kv_buffer_depth),
            ],
            out_specs=pl.BlockSpec((1, tq, dim_v), lambda b, qi, ki: (b, qi, 0)),
            scratch_shapes=[
                pltpu.VMEM((tq, dim_q), compute_dtype),  # cached scaled Q
                pltpu.VMEM((tq, 1), jnp.float32),        # running max m
                pltpu.VMEM((tq, 1), jnp.float32),        # running sum l
                pltpu.VMEM((tq, dim_v), jnp.float32),    # output accumulator
            ],
        ),
        compiler_params=pltpu.CompilerParams(
            dimension_semantics=("parallel", "parallel", "arbitrary"),
            vmem_limit_bytes=vmem_limit),
        cost_estimate=cost,
    )(qp, kp, vp)

    if lqp != len_q:
        out_padded = out_padded[:, :len_q, :]
    return out_padded


def _reference(Q, K, V, scale=None, mxu_dtype=None):
    """f32 ground-truth reference. `mxu_dtype` optionally pre-rounds Q/K/V
    through the kernel's MXU feed dtype so matmul-feed rounding cancels."""
    f32 = jnp.float32
    q, k, v = Q.astype(f32), K.astype(f32), V.astype(f32)
    if mxu_dtype is not None:
        q = q.astype(mxu_dtype).astype(f32)
        k = k.astype(mxu_dtype).astype(f32)
        v = v.astype(mxu_dtype).astype(f32)
    hi = lax.Precision.HIGHEST
    scores = jnp.einsum("bqd,bkd->bqk", q, k, precision=hi)
    if scale:
        scores = scores * scale
    attn = jax.nn.softmax(scores, axis=-1)
    return jnp.einsum("bqk,bkv->bqv", attn, v, precision=hi)


if __name__ == "__main__":
    key = jax.random.PRNGKey(0)
    kq, kk, kv2 = jax.random.split(key, 3)

    # --- test 1: shapes consistent with the module's forward (B, L, D) ---
    B, L, D = 2, 8, 32
    Q = jax.random.normal(kq, (B, L, D), dtype=jnp.float32)
    K = jax.random.normal(kk, (B, L, D), dtype=jnp.float32)
    V = jax.random.normal(kv2, (B, L, D), dtype=jnp.float32)
    scale = 1.0 / (D ** 0.5)

    out = scaled_dot_product_attention(Q, K, V, scale=scale)
    jax.block_until_ready(out)
    ref = _reference(Q, K, V, scale=scale, mxu_dtype=jnp.bfloat16)
    assert out.shape == (B, L, D)
    assert jnp.allclose(out, ref, atol=3e-2, rtol=3e-2), "mismatch vs reference"

    # scale=None and scale=0.0 both follow PyTorch's `if scale:` (skip scaling).
    out_ns = scaled_dot_product_attention(Q, K, V, scale=None)
    out_z = scaled_dot_product_attention(Q, K, V, scale=0.0)
    jax.block_until_ready((out_ns, out_z))
    assert jnp.allclose(out_ns, out_z, atol=1e-6, rtol=1e-6), \
        "scale=None and scale=0.0 should take the same path"
    ref_ns = _reference(Q, K, V, scale=None, mxu_dtype=jnp.bfloat16)
    assert jnp.allclose(out_ns, ref_ns, atol=3e-2, rtol=3e-2), \
        "mismatch (scale=None)"

    # --- test 2: ragged shapes exercising the gated kv mask + small dim_v ---
    B2, Lq2, Lk2, D2, Dv2 = 2, 40, 20, 32, 48
    k1, k2, k3 = jax.random.split(jax.random.PRNGKey(1), 3)
    Q2 = jax.random.normal(k1, (B2, Lq2, D2), dtype=jnp.float32)
    K2 = jax.random.normal(k2, (B2, Lk2, D2), dtype=jnp.float32)
    V2 = jax.random.normal(k3, (B2, Lk2, Dv2), dtype=jnp.float32)
    out2 = scaled_dot_product_attention(Q2, K2, V2, scale=1.0 / (D2 ** 0.5))
    jax.block_until_ready(out2)
    ref2 = _reference(Q2, K2, V2, scale=1.0 / (D2 ** 0.5), mxu_dtype=jnp.bfloat16)
    assert out2.shape == (B2, Lq2, Dv2)
    assert jnp.allclose(out2, ref2, atol=3e-2, rtol=3e-2), "mismatch (ragged)"

    # --- test 3: multiple q / kv tiles (online-softmax accumulation path) ---
    B3, Lq3, Lk3, D3 = 2, 32, 40, 32
    k4, k5, k6 = jax.random.split(jax.random.PRNGKey(2), 3)
    Q3 = jax.random.normal(k4, (B3, Lq3, D3), dtype=jnp.float32)
    K3 = jax.random.normal(k5, (B3, Lk3, D3), dtype=jnp.float32)
    V3 = jax.random.normal(k6, (B3, Lk3, D3), dtype=jnp.float32)
    out3 = scaled_dot_product_attention(Q3, K3, V3, scale=1.0 / (D3 ** 0.5),
                                        q_tile=16, kv_tile=16)
    jax.block_until_ready(out3)
    ref3 = _reference(Q3, K3, V3, scale=1.0 / (D3 ** 0.5), mxu_dtype=jnp.bfloat16)
    assert jnp.allclose(out3, ref3, atol=3e-2, rtol=3e-2), "mismatch (multi-tile)"

    # --- test 4: bf16 operands (MXU-native path, f32 accumulation) ---
    B4, L4, D4 = 1, 128, 128
    k7, k8, k9 = jax.random.split(jax.random.PRNGKey(3), 3)
    Q4 = jax.random.normal(k7, (B4, L4, D4), dtype=jnp.bfloat16)
    K4 = jax.random.normal(k8, (B4, L4, D4), dtype=jnp.bfloat16)
    V4 = jax.random.normal(k9, (B4, L4, D4), dtype=jnp.bfloat16)
    out4 = scaled_dot_product_attention(Q4, K4, V4, scale=1.0 / (D4 ** 0.5))
    jax.block_until_ready(out4)
    ref4 = _reference(Q4, K4, V4, scale=1.0 / (D4 ** 0.5))
    assert jnp.allclose(out4.astype(jnp.float32), ref4, atol=5e-2, rtol=5e-2), \
        "mismatch (bf16)"

    print("KERNEL_OK")
</pallas_src>

<mosaic_0001>
module attributes {stable_mosaic.version = 11 : i64} {
  func.func @_flash_fwd_kernel(%arg0: i32, %arg1: i32, %arg2: i32, %arg3: memref<1x8x32xf32, #tpu.memory_space<vmem>>, %arg4: memref<1x8x32xf32, #tpu.memory_space<vmem>>, %arg5: memref<1x8x32xf32, #tpu.memory_space<vmem>>, %arg6: memref<1x8x32xf32, #tpu.memory_space<vmem>>, %arg7: memref<8x32xbf16, #tpu.memory_space<vmem>>, %arg8: memref<8x1xf32, #tpu.memory_space<vmem>>, %arg9: memref<8x1xf32, #tpu.memory_space<vmem>>, %arg10: memref<8x32xf32, #tpu.memory_space<vmem>>) attributes {dimension_semantics = [#tpu.dimension_semantics<parallel>, #tpu.dimension_semantics<parallel>, #tpu.dimension_semantics<arbitrary>], iteration_bounds = array<i64: 2, 1, 1>, scalar_prefetch = 0 : i64, scratch_operands = 4 : i64, tpu.core_type = #tpu.core_type<tc>, window_params = [{transform_indices = @transform_0, window_bounds = array<i64: 1, 8, 32>}, {transform_indices = @transform_1, window_bounds = array<i64: 1, 8, 32>}, {transform_indices = @transform_2, window_bounds = array<i64: 1, 8, 32>}, {transform_indices = @transform_3, window_bounds = array<i64: 1, 8, 32>}]} {
    %c0_i32 = arith.constant 0 : i32
    %0 = arith.cmpi eq, %arg2, %c0_i32 : i32
    %1 = arith.extui %0 : i1 to i32
    %c0_i32_0 = arith.constant 0 : i32
    %2 = arith.cmpi ne, %1, %c0_i32_0 : i32
    scf.if %2 {
      %c0_25 = arith.constant 0 : index
      %c0_26 = arith.constant 0 : index
      %c0_27 = arith.constant 0 : index
      %37 = vector.load %arg3[%c0_25, %c0_26, %c0_27] : memref<1x8x32xf32, #tpu.memory_space<vmem>>, vector<1x8x32xf32>
      %38 = vector.shape_cast %37 : vector<1x8x32xf32> to vector<8x32xf32>
      %cst_28 = arith.constant 0.176776692 : f32
      %39 = vector.broadcast %cst_28 : f32 to vector<8x32xf32>
      %40 = arith.mulf %38, %39 : vector<8x32xf32>
      %41 = arith.truncf %40 : vector<8x32xf32> to vector<8x32xbf16>
      %c0_29 = arith.constant 0 : index
      %c0_30 = arith.constant 0 : index
      %42 = vector.load %arg7[%c0_29, %c0_30] : memref<8x32xbf16, #tpu.memory_space<vmem>>, vector<8x32xbf16>
      tpu.vector_store %arg7[%c0_29, %c0_30], %41 {strides = array<i32>} : memref<8x32xbf16, #tpu.memory_space<vmem>>, vector<8x32xbf16>,
      %cst_31 = arith.constant 0xFF800000 : f32
      %43 = vector.broadcast %cst_31 : f32 to vector<8x1xf32>
      %c0_32 = arith.constant 0 : index
      %c0_33 = arith.constant 0 : index
      %44 = vector.load %arg8[%c0_32, %c0_33] : memref<8x1xf32, #tpu.memory_space<vmem>>, vector<8x1xf32>
      tpu.vector_store %arg8[%c0_32, %c0_33], %43 {strides = array<i32>} : memref<8x1xf32, #tpu.memory_space<vmem>>, vector<8x1xf32>,
      %cst_34 = arith.constant 0.000000e+00 : f32
      %45 = vector.broadcast %cst_34 : f32 to vector<8x1xf32>
      %c0_35 = arith.constant 0 : index
      %c0_36 = arith.constant 0 : index
      %46 = vector.load %arg9[%c0_35, %c0_36] : memref<8x1xf32, #tpu.memory_space<vmem>>, vector<8x1xf32>
      tpu.vector_store %arg9[%c0_35, %c0_36], %45 {strides = array<i32>} : memref<8x1xf32, #tpu.memory_space<vmem>>, vector<8x1xf32>,
      %cst_37 = arith.constant 0.000000e+00 : f32
      %47 = vector.broadcast %cst_37 : f32 to vector<8x32xf32>
      %c0_38 = arith.constant 0 : index
      %c0_39 = arith.constant 0 : index
      %48 = vector.load %arg10[%c0_38, %c0_39] : memref<8x32xf32, #tpu.memory_space<vmem>>, vector<8x32xf32>
      tpu.vector_store %arg10[%c0_38, %c0_39], %47 {strides = array<i32>} : memref<8x32xf32, #tpu.memory_space<vmem>>, vector<8x32xf32>,
    } else {
    }
    %c0 = arith.constant 0 : index
    %c0_1 = arith.constant 0 : index
    %c0_2 = arith.constant 0 : index
    %3 = vector.load %arg4[%c0, %c0_1, %c0_2] : memref<1x8x32xf32, #tpu.memory_space<vmem>>, vector<1x8x32xf32>
    %4 = vector.shape_cast %3 : vector<1x8x32xf32> to vector<8x32xf32>
    %5 = arith.truncf %4 : vector<8x32xf32> to vector<8x32xbf16>
    %c0_3 = arith.constant 0 : index
    %c0_4 = arith.constant 0 : index
    %c0_5 = arith.constant 0 : index
    %6 = vector.load %arg5[%c0_3, %c0_4, %c0_5] : memref<1x8x32xf32, #tpu.memory_space<vmem>>, vector<1x8x32xf32>
    %7 = vector.shape_cast %6 : vector<1x8x32xf32> to vector<8x32xf32>
    %8 = arith.truncf %7 : vector<8x32xf32> to vector<8x32xbf16>
    %c0_6 = arith.constant 0 : index
    %c0_7 = arith.constant 0 : index
    %9 = vector.load %arg7[%c0_6, %c0_7] : memref<8x32xbf16, #tpu.memory_space<vmem>>, vector<8x32xbf16>
    %cst = arith.constant dense<0.000000e+00> : vector<8x8xf32>
    %10 = tpu.matmul %9, %5, %cst {dimension_numbers = #tpu.dot_dimension_numbers<[1], [1], [0], [0], [0, 0, 1, 0], [], []>} : vector<8x32xbf16>, vector<8x32xbf16>, vector<8x8xf32> -> vector<8x8xf32>
    %c0_8 = arith.constant 0 : index
    %c0_9 = arith.constant 0 : index
    %11 = vector.load %arg8[%c0_8, %c0_9] : memref<8x1xf32, #tpu.memory_space<vmem>>, vector<8x1xf32>
    %cst_10 = arith.constant dense<0xFF800000> : vector<8xf32>
    %12 = vector.multi_reduction <maximumf>, %10, %cst_10 [1] : vector<8x8xf32> to vector<8xf32>
    %13 = vector.shape_cast %12 : vector<8xf32> to vector<8x1xf32>
    %14 = arith.maximumf %11, %13 : vector<8x1xf32>
    %15 = arith.subf %11, %14 : vector<8x1xf32>
    %16 = math.exp %15 : vector<8x1xf32>
    %17 = vector.broadcast %14 : vector<8x1xf32> to vector<8x8xf32>
    %18 = arith.subf %10, %17 : vector<8x8xf32>
    %19 = math.exp %18 : vector<8x8xf32>
    %c0_11 = arith.constant 0 : index
    %c0_12 = arith.constant 0 : index
    %20 = vector.load %arg9[%c0_11, %c0_12] : memref<8x1xf32, #tpu.memory_space<vmem>>, vector<8x1xf32>
    %21 = arith.mulf %16, %20 : vector<8x1xf32>
    %cst_13 = arith.constant dense<0.000000e+00> : vector<8xf32>
    %22 = vector.multi_reduction <add>, %19, %cst_13 [1] : vector<8x8xf32> to vector<8xf32>
    %23 = vector.shape_cast %22 : vector<8xf32> to vector<8x1xf32>
    %24 = arith.addf %21, %23 : vector<8x1xf32>
    %c0_14 = arith.constant 0 : index
    %c0_15 = arith.constant 0 : index
    %25 = vector.load %arg9[%c0_14, %c0_15] : memref<8x1xf32, #tpu.memory_space<vmem>>, vector<8x1xf32>
    tpu.vector_store %arg9[%c0_14, %c0_15], %24 {strides = array<i32>} : memref<8x1xf32, #tpu.memory_space<vmem>>, vector<8x1xf32>,
    %c0_16 = arith.constant 0 : index
    %c0_17 = arith.constant 0 : index
    %26 = vector.load %arg10[%c0_16, %c0_17] : memref<8x32xf32, #tpu.memory_space<vmem>>, vector<8x32xf32>
    %27 = vector.broadcast %16 : vector<8x1xf32> to vector<8x32xf32>
    %28 = arith.mulf %27, %26 : vector<8x32xf32>
    %29 = arith.truncf %19 : vector<8x8xf32> to vector<8x8xbf16>
    %cst_18 = arith.constant dense<0.000000e+00> : vector<8x32xf32>
    %30 = tpu.matmul %29, %8, %cst_18 {dimension_numbers = #tpu.dot_dimension_numbers<[1], [0], [0], [1], [0, 0, 1, 1], [], []>} : vector<8x8xbf16>, vector<8x32xbf16>, vector<8x32xf32> -> vector<8x32xf32>
    %31 = arith.addf %28, %30 : vector<8x32xf32>
    %c0_19 = arith.constant 0 : index
    %c0_20 = arith.constant 0 : index
    %32 = vector.load %arg10[%c0_19, %c0_20] : memref<8x32xf32, #tpu.memory_space<vmem>>, vector<8x32xf32>
    tpu.vector_store %arg10[%c0_19, %c0_20], %31 {strides = array<i32>} : memref<8x32xf32, #tpu.memory_space<vmem>>, vector<8x32xf32>,
    %c0_21 = arith.constant 0 : index
    %c0_22 = arith.constant 0 : index
    %33 = vector.load %arg8[%c0_21, %c0_22] : memref<8x1xf32, #tpu.memory_space<vmem>>, vector<8x1xf32>
    tpu.vector_store %arg8[%c0_21, %c0_22], %14 {strides = array<i32>} : memref<8x1xf32, #tpu.memory_space<vmem>>, vector<8x1xf32>,
    %c0_i32_23 = arith.constant 0 : i32
    %34 = arith.cmpi eq, %arg2, %c0_i32_23 : i32
    %35 = arith.extui %34 : i1 to i32
    %c0_i32_24 = arith.constant 0 : i32
    %36 = arith.cmpi ne, %35, %c0_i32_24 : i32
    scf.if %36 {
      %c0_25 = arith.constant 0 : index
      %c0_26 = arith.constant 0 : index
      %37 = vector.load %arg10[%c0_25, %c0_26] : memref<8x32xf32, #tpu.memory_space<vmem>>, vector<8x32xf32>
      %c0_27 = arith.constant 0 : index
      %c0_28 = arith.constant 0 : index
      %38 = vector.load %arg9[%c0_27, %c0_28] : memref<8x1xf32, #tpu.memory_space<vmem>>, vector<8x1xf32>
      %39 = tpu.reciprocal %38 {approx = true} : vector<8x1xf32> -> vector<8x1xf32>
      %40 = vector.broadcast %39 : vector<8x1xf32> to vector<8x32xf32>
      %41 = arith.mulf %37, %40 : vector<8x32xf32>
      %c0_29 = arith.constant 0 : index
      %c0_30 = arith.constant 0 : index
      %c0_31 = arith.constant 0 : index
      %42 = vector.load %arg6[%c0_29, %c0_30, %c0_31] : memref<1x8x32xf32, #tpu.memory_space<vmem>>, vector<1x8x32xf32>
      %43 = vector.shape_cast %42 : vector<1x8x32xf32> to vector<8x32xf32>
      %44 = vector.shape_cast %41 : vector<8x32xf32> to vector<1x8x32xf32>
      tpu.vector_store %arg6[%c0_29, %c0_30, %c0_31], %44 {strides = array<i32>} : memref<1x8x32xf32, #tpu.memory_space<vmem>>, vector<1x8x32xf32>,
    } else {
    }
    return
  }
  func.func @transform_0(%arg0: i32, %arg1: i32, %arg2: i32) -> (i32, i32, i32) {
    %c0_i32 = arith.constant 0 : i32
    %c0_i32_0 = arith.constant 0 : i32
    return %arg0, %arg1, %c0_i32 : i32, i32, i32
  }
  func.func @transform_1(%arg0: i32, %arg1: i32, %arg2: i32) -> (i32, i32, i32) {
    %c0_i32 = arith.constant 0 : i32
    %c0_i32_0 = arith.constant 0 : i32
    return %arg0, %arg2, %c0_i32 : i32, i32, i32
  }
  func.func @transform_2(%arg0: i32, %arg1: i32, %arg2: i32) -> (i32, i32, i32) {
    %c0_i32 = arith.constant 0 : i32
    %c0_i32_0 = arith.constant 0 : i32
    return %arg0, %arg2, %c0_i32 : i32, i32, i32
  }
  func.func @transform_3(%arg0: i32, %arg1: i32, %arg2: i32) -> (i32, i32, i32) {
    %c0_i32 = arith.constant 0 : i32
    %c0_i32_0 = arith.constant 0 : i32
    return %arg0, %arg1, %c0_i32 : i32, i32, i32
  }
}

</mosaic_0001>

<llo_original>
// kernel: tpu_custom_call.1
$region0: #{tpu_custom_call.1}
  #allocation0 [shape = 'u32[]', space=smem, size = 0x4, offset = 0x4, fixed_abs, tag = 'smem constant byte address 0x4 - core index']
  #allocation1 [shape = 'u32[72,128]{1,0:T(1,128)}', space=vmem, size = 0x9000, scoped, tag = 'internal scratch']
  #allocation2 [shape = 'bf16[8,32]{1,0:T(8,128)(2,1)}', space=vmem, size = 0x800, scoped, tag = 'scratch operand']
  #allocation3 [shape = 'f32[8,1]{1,0:T(8,128)}', space=vmem, size = 0x1000, scoped, tag = 'scratch operand']
  #allocation4 [shape = 'f32[8,1]{1,0:T(8,128)}', space=vmem, size = 0x1000, scoped, tag = 'scratch operand']
  #allocation5 [shape = 'f32[8,32]{1,0:T(8,128)}', space=vmem, size = 0x1000, scoped, tag = 'scratch operand']
  %s0 = inlined_call_operand.hbm [shape: f32[2,8,32], index: 0, kind: input, shape index: {}]
  %s1 = inlined_call_operand.hbm [shape: f32[2,8,32], index: 1, kind: input, shape index: {}]
  %s2 = inlined_call_operand.hbm [shape: f32[2,8,32], index: 2, kind: input, shape index: {}]
  %s3 = inlined_call_operand.hbm [shape: f32[2,8,32], index: 3, kind: output, shape index: {}]
  %s4 = sld [smem:[#allocation0]]
  $region65: #{tpu_custom_call.1} parent=0
    _
  %s6 = ssub.s32 1, %s4
  %s7 = scalar_select 0, %s6, %s4
  $region1: #{tpu_custom_call.1} parent=0
    #allocation6 [shape = 'u8[8192]{0}', space=vmem, size = 0x2000, scoped, tag = 'input window, operand 0']
    #allocation7 [shape = 's32[2]{0}', space=sflag, size = 0x8, scoped, tag = 'scoped memory for tpu_custom_call.1']
    #allocation8 [shape = 's32[2]{0}', space=sflag, size = 0x8, scoped, tag = 'scoped memory for tpu_custom_call.1']
    #allocation9 [shape = 'u8[8192]{0}', space=vmem, size = 0x2000, scoped, tag = 'input window, operand 1']
    #allocation10 [shape = 's32[2]{0}', space=sflag, size = 0x8, scoped, tag = 'scoped memory for tpu_custom_call.1']
    #allocation11 [shape = 'u8[8192]{0}', space=vmem, size = 0x2000, scoped, tag = 'input window, operand 2']
    #allocation12 [shape = 'u8[8192]{0}', space=vmem, size = 0x2000, scoped, tag = 'output window, operand 0']
    %8 = vsyncpa [#allocation7], 0
    %s9 = scalar_lea.sflag [#allocation7], 1
    %10 = vsyncpa %s9, 0
    %11 = vsyncpa [#allocation10], 0
    %s12 = scalar_lea.sflag [#allocation10], 1
    %13 = vsyncpa %s12, 0
    %14 = vsyncpa [#allocation8], 0
    %s15 = scalar_lea.sflag [#allocation8], 1
    %16 = vsyncpa %s15, 0
    loop: start=0, step=1, limit=4
    $region2: #{tpu_custom_call.1} parent=1 // loop_pre_header
      _
    $region3: #{tpu_custom_call.1} parent=1 // loop_header
      %s18 = sphi 0, %s22
      %p19 = scmp.ge.s32.totalorder %s18, 4
      %s25 = sphi 0, %s44
      %s26 = sphi 0, %s40
      %s27 = sphi 0, %s36
      %s28 = sphi 0, %s25
      %s29 = sphi 0, %s26
      %s30 = sphi 0, %s27
      %s31 = sphi 0, %s28
      %s32 = sphi 0, %s29
      %s33 = sphi 0, %s30
      %s49 = sphi 0, %s51
      %s52 = sphi 0, %s49
      %s53 = sphi 0, %s52
      %s69 = sphi 0, %s53
      %s77 = sphi 0, %s79
      %s80 = sphi 0, %s77
      %s81 = sphi 0, %s80
      %s97 = sphi 0, %s81
      %s105 = sphi 0, %s107
      %s108 = sphi 0, %s105
      %s109 = sphi 0, %s108
      %s125 = sphi 0, %s109
      %s133 = sphi 0, %s135
      %s136 = sphi 0, %s133
      %s137 = sphi 0, %s136
      %s153 = sphi 0, %s137
    $region4: #{tpu_custom_call.1} parent=1 // loop_header_branch
      %21 = sbr.rel (%p19) target = $region8
    $region5: #{tpu_custom_call.1} parent=1 // loop_body
      %s23 = ssub.s32 %s18, 1
      %s24 = ssub.s32 %s18, 2
      %s34 = sadd.s32 1, %s27
      %p35 = scmp.ge.s32.totalorder %s34, 1
      %s36 = scalar_select %p35, 0, %s34
      %s37 = sadd.s32 1, %s26
      %s38 = scalar_select %p35, %s37, %s26
      %p39 = scmp.ge.s32.totalorder %s38, 1
      %s40 = scalar_select %p39, 0, %s38
      %s41 = sadd.s32 1, %s25
      %s42 = scalar_select %p39, %s41, %s25
      %p43 = scmp.ge.s32.totalorder %s42, 2
      %s44 = scalar_select %p43, 0, %s42
      %s45 = ssub.s32 %s25, %s44
      %s46 = ssub.s32 %s26, %s40
      %s47 = sor.u32 %s45, %s46
      %p48 = scmp.eq.s32.totalorder %s47, 0
      %s50 = sadd.s32 %s49, 1
      %s51 = scalar_select %p48, %s49, %s50
      %p54 = pneg %p48
      %p55 = scmp.eq.s32.totalorder %s18, 1
      %p56 = por %p54, %p55
      %p57 = scmp.ne.s32.totalorder %s49, %s52
      %p58 = scmp.eq.s32.totalorder %s18, 0
      %p59 = por %p57, %p58
      %p60 = scmp.ne.s32.totalorder %s49, %s52
      %p61 = scmp.eq.s32.totalorder %s23, 1
      %p62 = por %p60, %p61
      %p63 = scmp.ne.s32.totalorder %s52, %s53
      %p64 = scmp.eq.s32.totalorder %s23, 0
      %p65 = por %p63, %p64
      %p66 = scmp.ne.s32.totalorder %s52, %s53
      %p67 = scmp.eq.s32.totalorder %s24, 1
      %p68 = por %p66, %p67
      %p70 = scmp.ne.s32.totalorder %s53, %s69
      %p71 = scmp.eq.s32.totalorder %s24, 0
      %p72 = por %p70, %p71
      %s73 = ssub.s32 %s25, %s44
      %s74 = ssub.s32 %s27, %s36
      %s75 = sor.u32 %s73, %s74
      %p76 = scmp.eq.s32.totalorder %s75, 0
      %s78 = sadd.s32 %s77, 1
      %s79 = scalar_select %p76, %s77, %s78
      %p82 = pneg %p76
      %p83 = scmp.eq.s32.totalorder %s18, 1
      %p84 = por %p82, %p83
      %p85 = scmp.ne.s32.totalorder %s77, %s80
      %p86 = scmp.eq.s32.totalorder %s18, 0
      %p87 = por %p85, %p86
      %p88 = scmp.ne.s32.totalorder %s77, %s80
      %p89 = scmp.eq.s32.totalorder %s23, 1
      %p90 = por %p88, %p89
      %p91 = scmp.ne.s32.totalorder %s80, %s81
      %p92 = scmp.eq.s32.totalorder %s23, 0
      %p93 = por %p91, %p92
      %p94 = scmp.ne.s32.totalorder %s80, %s81
      %p95 = scmp.eq.s32.totalorder %s24, 1
      %p96 = por %p94, %p95
      %p98 = scmp.ne.s32.totalorder %s81, %s97
      %p99 = scmp.eq.s32.totalorder %s24, 0
      %p100 = por %p98, %p99
      %s101 = ssub.s32 %s25, %s44
      %s102 = ssub.s32 %s27, %s36
      %s103 = sor.u32 %s101, %s102
      %p104 = scmp.eq.s32.totalorder %s103, 0
      %s106 = sadd.s32 %s105, 1
      %s107 = scalar_select %p104, %s105, %s106
      %p110 = pneg %p104
      %p111 = scmp.eq.s32.totalorder %s18, 1
      %p112 = por %p110, %p111
      %p113 = scmp.ne.s32.totalorder %s105, %s108
      %p114 = scmp.eq.s32.totalorder %s18, 0
      %p115 = por %p113, %p114
      %p116 = scmp.ne.s32.totalorder %s105, %s108
      %p117 = scmp.eq.s32.totalorder %s23, 1
      %p118 = por %p116, %p117
      %p119 = scmp.ne.s32.totalorder %s108, %s109
      %p120 = scmp.eq.s32.totalorder %s23, 0
      %p121 = por %p119, %p120
      %p122 = scmp.ne.s32.totalorder %s108, %s109
      %p123 = scmp.eq.s32.totalorder %s24, 1
      %p124 = por %p122, %p123
      %p126 = scmp.ne.s32.totalorder %s109, %s125
      %p127 = scmp.eq.s32.totalorder %s24, 0
      %p128 = por %p126, %p127
      %s129 = ssub.s32 %s25, %s44
      %s130 = ssub.s32 %s26, %s40
      %s131 = sor.u32 %s129, %s130
      %p132 = scmp.eq.s32.totalorder %s131, 0
      %s134 = sadd.s32 %s133, 1
      %s135 = scalar_select %p132, %s133, %s134
      %p138 = pneg %p132
      %p139 = scmp.eq.s32.totalorder %s18, 1
      %p140 = por %p138, %p139
      %p141 = scmp.ne.s32.totalorder %s133, %s136
      %p142 = scmp.eq.s32.totalorder %s18, 0
      %p143 = por %p141, %p142
      %p144 = scmp.ne.s32.totalorder %s133, %s136
      %p145 = scmp.eq.s32.totalorder %s23, 1
      %p146 = por %p144, %p145
      %p147 = scmp.ne.s32.totalorder %s136, %s137
      %p148 = scmp.eq.s32.totalorder %s23, 0
      %p149 = por %p147, %p148
      %p150 = scmp.ne.s32.totalorder %s136, %s137
      %p151 = scmp.eq.s32.totalorder %s24, 1
      %p152 = por %p150, %p151
      %p154 = scmp.ne.s32.totalorder %s137, %s153
      %p155 = scmp.eq.s32.totalorder %s24, 0
      %p156 = por %p154, %p155
      %p157 = scmp.le.s32.totalorder 1, %s18
      %p158 = scmp.lt.s32.totalorder %s18, 3
      %p159 = pnand %p157, %p158
      %p160 = pneg %p159
      // Predicated region
      $region9: #{tpu_custom_call.1} parent=5 // pred_check
        _
      $region10: #{tpu_custom_call.1} parent=5 // pred_check_branch
        %162 = sbr.rel (%p159) target = $region12
      $region11: #{tpu_custom_call.1} parent=5 // pred_region
        %s163 = ssub.s32 %s18, 1
      $region12: #{tpu_custom_call.1} parent=5 // pred_fallthru
        _
      %p164 = scmp.lt.s32.totalorder %s18, 2
      // Predicated region
      $region13: #{tpu_custom_call.1} parent=5 // pred_check
        %p165 = pneg %p164
      $region14: #{tpu_custom_call.1} parent=5 // pred_check_branch
        %167 = sbr.rel (%p165) target = $region16
      $region15: #{tpu_custom_call.1} parent=5 // pred_region
        // Predicated region
        $region17: #{tpu_custom_call.1} parent=15 // pred_check
          %p168 = pneg %p59
        $region18: #{tpu_custom_call.1} parent=15 // pred_check_branch
          %170 = sbr.rel (%p168) target = $region20
        $region19: #{tpu_custom_call.1} parent=15 // pred_region
          %s171 = sand.u32 %s49, 1
          %s172 = scalar_lea.sflag [#allocation7], %s171
          %s173 = sand.u32 %s49, 1
          %s174 = smul.addr %s173, 8
          %s175 = scalar_lea.vmem [#allocation6], %s174
          %177 = vsyncadd %s172, 0
          %s178 = sadd.s32 %s26, %s25
          %s179 = smul.addr %s178, 8
          %s180 = scalar_lea.hbm %s0, %s179
          %s182 = sshll.u32 %s180, 4
          %s183 = int_to_ptr.hbm [resolvable:$true] %s182
          %s184 = sshll.u32 %s175, 4
          %s185 = int_to_ptr.vmem [resolvable:$true] %s184
          %187 = dma.hbm_to_vmem [thread:$0]  %s183, 128, %s185, %s172
        $region20: #{tpu_custom_call.1} parent=15 // pred_fallthru
          _
        // Predicated region
        $region21: #{tpu_custom_call.1} parent=15 // pred_check
          %p188 = pneg %p87
        $region22: #{tpu_custom_call.1} parent=15 // pred_check_branch
          %190 = sbr.rel (%p188) target = $region24
        $region23: #{tpu_custom_call.1} parent=15 // pred_region
          %s191 = sand.u32 %s18, 1
          %s192 = scalar_lea.sflag [#allocation10], %s191
          %s193 = sand.u32 %s77, 1
          %s194 = smul.addr %s193, 8
          %s195 = scalar_lea.vmem [#allocation9], %s194
          %197 = vsyncadd %s192, 0
          %s198 = sadd.s32 %s27, %s25
          %s199 = smul.addr %s198, 8
          %s200 = scalar_lea.hbm %s1, %s199
          %s202 = sshll.u32 %s200, 4
          %s203 = int_to_ptr.hbm [resolvable:$true] %s202
          %s204 = sshll.u32 %s195, 4
          %s205 = int_to_ptr.vmem [resolvable:$true] %s204
          %207 = dma.hbm_to_vmem [thread:$0]  %s203, 128, %s205, %s192
        $region24: #{tpu_custom_call.1} parent=15 // pred_fallthru
          _
        // Predicated region
        $region25: #{tpu_custom_call.1} parent=15 // pred_check
          %p208 = pneg %p115
        $region26: #{tpu_custom_call.1} parent=15 // pred_check_branch
          %210 = sbr.rel (%p208) target = $region28
        $region27: #{tpu_custom_call.1} parent=15 // pred_region
          %s211 = sand.u32 %s18, 1
          %s212 = scalar_lea.sflag [#allocation10], %s211
          %s213 = sand.u32 %s105, 1
          %s214 = smul.addr %s213, 8
          %s215 = scalar_lea.vmem [#allocation11], %s214
          %217 = vsyncadd %s212, 0
          %s218 = sadd.s32 %s27, %s25
          %s219 = smul.addr %s218, 8
          %s220 = scalar_lea.hbm %s2, %s219
          %s222 = sshll.u32 %s220, 4
          %s223 = int_to_ptr.hbm [resolvable:$true] %s222
          %s224 = sshll.u32 %s215, 4
          %s225 = int_to_ptr.vmem [resolvable:$true] %s224
          %227 = dma.hbm_to_vmem [thread:$0]  %s223, 128, %s225, %s212
        $region28: #{tpu_custom_call.1} parent=15 // pred_fallthru
          _
      $region16: #{tpu_custom_call.1} parent=5 // pred_fallthru
        _
      %p228 = scmp.le.s32.totalorder 1, %s18
      %p229 = scmp.lt.s32.totalorder %s18, 3
      %p230 = pnand %p228, %p229
      %p231 = pneg %p230
      // Predicated region
      $region29: #{tpu_custom_call.1} parent=5 // pred_check
        _
      $region30: #{tpu_custom_call.1} parent=5 // pred_check_branch
        %233 = sbr.rel (%p230) target = $region32
      $region31: #{tpu_custom_call.1} parent=5 // pred_region
        %s234 = ssub.s32 %s18, 1
        %s235 = sand.u32 %s52, 1
        %s236 = scalar_lea.sflag [#allocation7], %s235
        %s237 = sand.u32 %s52, 1
        %s238 = smul.addr %s237, 8
        %s239 = scalar_lea.vmem [#allocation6], %s238
        // Predicated region
        $region33: #{tpu_custom_call.1} parent=31 // pred_check
          %p240 = pneg %p65
        $region34: #{tpu_custom_call.1} parent=31 // pred_check_branch
          %242 = sbr.rel (%p240) target = $region36
        $region35: #{tpu_custom_call.1} parent=31 // pred_region
          %244 = dma.done %s236, 128
        $region36: #{tpu_custom_call.1} parent=31 // pred_fallthru
          _
        %s245 = sand.u32 %s23, 1
        %s246 = scalar_lea.sflag [#allocation10], %s245
        %s247 = sand.u32 %s80, 1
        %s248 = smul.addr %s247, 8
        %s249 = scalar_lea.vmem [#allocation9], %s248
        // Predicated region
        $region37: #{tpu_custom_call.1} parent=31 // pred_check
          %p250 = pneg %p93
        $region38: #{tpu_custom_call.1} parent=31 // pred_check_branch
          %252 = sbr.rel (%p250) target = $region40
        $region39: #{tpu_custom_call.1} parent=31 // pred_region
          %254 = dma.done %s246, 128
        $region40: #{tpu_custom_call.1} parent=31 // pred_fallthru
          _
        %s255 = sand.u32 %s23, 1
        %s256 = scalar_lea.sflag [#allocation10], %s255
        %s257 = sand.u32 %s108, 1
        %s258 = smul.addr %s257, 8
        %s259 = scalar_lea.vmem [#allocation11], %s258
        // Predicated region
        $region41: #{tpu_custom_call.1} parent=31 // pred_check
          %p260 = pneg %p121
        $region42: #{tpu_custom_call.1} parent=31 // pred_check_branch
          %262 = sbr.rel (%p260) target = $region44
        $region43: #{tpu_custom_call.1} parent=31 // pred_region
          %264 = dma.done %s256, 128
        $region44: #{tpu_custom_call.1} parent=31 // pred_fallthru
          _
        %s265 = sand.u32 %s52, 1
        %s266 = scalar_lea.sflag [#allocation7], %s265
        %s267 = sand.u32 %s52, 1
        %s268 = smul.addr %s267, 8
        %s269 = scalar_lea.vmem [#allocation6], %s268
        %p270 = pneg %p65
        %p271 = pneg %p62
        %s272 = sand.u32 %s23, 1
        %s273 = scalar_lea.sflag [#allocation10], %s272
        %s274 = sand.u32 %s80, 1
        %s275 = smul.addr %s274, 8
        %s276 = scalar_lea.vmem [#allocation9], %s275
        %p277 = pneg %p93
        %p278 = pneg %p90
        %s279 = sand.u32 %s23, 1
        %s280 = scalar_lea.sflag [#allocation10], %s279
        %s281 = sand.u32 %s108, 1
        %s282 = smul.addr %s281, 8
        %s283 = scalar_lea.vmem [#allocation11], %s282
        %p284 = pneg %p121
        %p285 = pneg %p118
        %p286 = pneg %p149
        %p287 = pneg %p146
        %s288 = sand.u32 %s136, 1
        %s289 = scalar_lea.sflag [#allocation8], %s288
        %s290 = sand.u32 %s136, 1
        %s291 = smul.addr %s290, 8
        %s292 = scalar_lea.vmem [#allocation12], %s291
        %p294 = scmp.eq.s32.totalorder %s30, 0
        // Predicated region
        $region45: #{tpu_custom_call.1} parent=31 // pred_check
          %p295 = pneg %p294
        $region46: #{tpu_custom_call.1} parent=31 // pred_check_branch
          %297 = sbr.rel (%p295) target = $region48
        $region47: #{tpu_custom_call.1} parent=31 // pred_region
          %v298 = vld [vmem:[%s239] sm:$0xff]
          %v299 = vmul.f32 %v298, 0.17677669
          %v300 = vpack.c.bf16 %v299, %v299
          %vm301 = vcmask 257024
          %302 = vst.msk [vmem:[#allocation2] sm:$0xf] %vm301, %v300
          %vm303 = vcmask 7168
          %304 = vst.msk [vmem:[#allocation3] sm:$0xff] %vm303, -inf
          %305 = vst.msk [vmem:[#allocation4] sm:$0xff] %vm303, 0.0
          %vm306 = vcmask 261120
          %307 = vst.msk [vmem:[#allocation5] sm:$0xff] %vm306, 0.0
        $region48: #{tpu_custom_call.1} parent=31 // pred_fallthru
          _
        %v308 = vld [vmem:[%s249] sm:$0xff]
        %v309 = vpack.c.bf16 %v308, %v308
        %v310 = vld [vmem:[%s259] sm:$0xff]
        %v311 = vpack.c.bf16 %v310, %v310
        %v312 = vld [vmem:[#allocation2] sm:$0xf]
        %vm313 = vcmask 261120
        %v315 = vsel %vm313, %v312, 0
        %v318 = vsel %vm313, %v309, 0
        %320 = vmatpush.bf16.xpose.msra.mxu0 0
        %321 = vmatpush.bf16.xpose.msra.mxu0 0
        %322 = vmatpush.bf16.xpose.msra.mxu0 0
        %323 = vmatpush.bf16.xpose.msra.mxu0 0
        %324 = vmatpush.bf16.xpose.msra.mxu0 0
        %325 = vmatpush.bf16.xpose.msra.mxu0 0
        %326 = vmatpush.bf16.xpose.msra.mxu0 0
        %327 = vmatpush.bf16.xpose.msra.mxu0 %v318
        %328 = vmatmul.bf16.gmra.mxu0 %v315
        %v329 = vpop.f32.mrf.mxu0
        %v330 = vadd.f32 0.0, %v329
        %v331 = vpop.f32.mrf.mxu0
        %332 = vdwg.mxu0
        %v333 = vld [vmem:[#allocation3] sm:$0xff]
        %vm334 = vcmask 64512
        %v335 = vsel %vm334, %v330, -inf
        %336 = vmax.xlane.f32.xlu0 %v335
        %v337 = vpop.xlane.xlu0 %336
        %v338 = vmax.f32 %v333, %v337
        %v339 = vsub.f32 %v333, %v338
        %v340 = vmul.f32 %v339, 1.442695
        %v341 = vpow.pop %v340
        %343 = vset.pattern.permute.xlu0 0
        %344 = vperm.xlu0 %343, %v338
        %v345 = vpop.permute.xlu0 %344
        %v347 = vsub.f32 %v330, %v345
        %v348 = vmul.f32 %v347, 1.442695
        %v349 = vpow.pop %v348
        %v350 = vld [vmem:[#allocation4] sm:$0xff]
        %v351 = vmul.f32 %v341, %v350
        %v352 = vsel %vm334, %v349, 0.0
        %353 = vadd.xlane.f32.xlu0 %v352
        %v354 = vpop.xlane.xlu0 %353
        %v355 = vadd.f32 %v351, %v354
        %vm356 = vcmask 7168
        %357 = vst.msk [vmem:[#allocation4] sm:$0xff] %vm356, %v355
        %v358 = vld [vmem:[#allocation5] sm:$0xff]
        %360 = vset.pattern.permute.xlu0 0
        %361 = vperm.xlu0 %360, %v341
        %v362 = vpop.permute.xlu0 %361
        %v364 = vmul.f32 %v362, %v358
        %v365 = vpack.c.bf16 %v349, %v349
        %v367 = vsel %vm334, %v365, 0
        %vm369 = vcmask 1043456
        %v371 = vsel %vm369, %v311, 0
        %373 = vmatpush.bf16.msra.mxu0 0
        %374 = vmatpush.bf16.msra.mxu0 0
        %375 = vmatpush.bf16.msra.mxu0 0
        %376 = vmatpush.bf16.msra.mxu0 0
        %377 = vmatpush.bf16.msra.mxu0 0
        %378 = vmatpush.bf16.msra.mxu0 0
        %379 = vmatpush.bf16.msra.mxu0 0
        %380 = vmatpush.bf16.msra.mxu0 %v371
        %381 = vmatmul.bf16.gmra.mxu0 %v367
        %v382 = vpop.f32.mrf.mxu0
        %v383 = vadd.f32 0.0, %v382
        %v384 = vpop.f32.mrf.mxu0
        %385 = vdwg.mxu0
        %v386 = vadd.f32 %v364, %v383
        %387 = vst.msk [vmem:[#allocation5] sm:$0xff] %vm313, %v386
        %388 = vst.msk [vmem:[#allocation3] sm:$0xff] %vm356, %v338
        // Predicated region
        $region49: #{tpu_custom_call.1} parent=31 // pred_check
          %p389 = pneg %p294
        $region50: #{tpu_custom_call.1} parent=31 // pred_check_branch
          %391 = sbr.rel (%p389) target = $region52
        $region51: #{tpu_custom_call.1} parent=31 // pred_region
          %v392 = vld [vmem:[#allocation5] sm:$0xff]
          %v393 = vld [vmem:[#allocation4] sm:$0xff]
          %v394 = vrcp.pop %v393
          %396 = vset.pattern.permute.xlu0 0
          %397 = vperm.xlu0 %396, %v394
          %v398 = vpop.permute.xlu0 %397
          %v400 = vmul.f32 %v392, %v398
          %401 = vst.msk [vmem:[%s292] sm:$0xff] %vm313, %v400
        $region52: #{tpu_custom_call.1} parent=31 // pred_fallthru
          _
        %s402 = sand.u32 %s136, 1
        %s403 = scalar_lea.sflag [#allocation8], %s402
        %s404 = sand.u32 %s136, 1
        %s405 = smul.addr %s404, 8
        %s406 = scalar_lea.vmem [#allocation12], %s405
        // Predicated region
        $region53: #{tpu_custom_call.1} parent=31 // pred_check
          %p407 = pneg %p146
        $region54: #{tpu_custom_call.1} parent=31 // pred_check_branch
          %409 = sbr.rel (%p407) target = $region56
        $region55: #{tpu_custom_call.1} parent=31 // pred_region
          %411 = vsyncadd %s403, 0
          %s412 = sadd.s32 %s29, %s28
          %s413 = smul.addr %s412, 8
          %s414 = scalar_lea.hbm %s3, %s413
          %s416 = sshll.u32 %s406, 4
          %s417 = int_to_ptr.vmem [resolvable:$true] %s416
          %s418 = sshll.u32 %s414, 4
          %s419 = int_to_ptr.hbm [resolvable:$true] %s418
          %421 = dma.vmem_to_hbm [thread:$0]  %s417, 128, %s419, %s403
        $region56: #{tpu_custom_call.1} parent=31 // pred_fallthru
          _
      $region32: #{tpu_custom_call.1} parent=5 // pred_fallthru
        _
      %p422 = scmp.le.s32.totalorder 2, %s18
      // Predicated region
      $region57: #{tpu_custom_call.1} parent=5 // pred_check
        %p423 = pneg %p422
      $region58: #{tpu_custom_call.1} parent=5 // pred_check_branch
        %425 = sbr.rel (%p423) target = $region60
      $region59: #{tpu_custom_call.1} parent=5 // pred_region
        %s426 = ssub.s32 %s18, 2
        // Predicated region
        $region61: #{tpu_custom_call.1} parent=59 // pred_check
          %p427 = pneg %p152
        $region62: #{tpu_custom_call.1} parent=59 // pred_check_branch
          %429 = sbr.rel (%p427) target = $region64
        $region63: #{tpu_custom_call.1} parent=59 // pred_region
          %s430 = sand.u32 %s137, 1
          %s431 = scalar_lea.sflag [#allocation8], %s430
          %s432 = sand.u32 %s137, 1
          %s433 = smul.addr %s432, 8
          %s434 = scalar_lea.vmem [#allocation12], %s433
          %436 = dma.done %s431, 128
        $region64: #{tpu_custom_call.1} parent=59 // pred_fallthru
          _
      $region60: #{tpu_custom_call.1} parent=5 // pred_fallthru
        _
    $region6: #{tpu_custom_call.1} parent=1 // loop_footer
      %s22 = sadd.s32 1, %s18
    $region7: #{tpu_custom_call.1} parent=1 // loop_footer_branch
      %17 = sbr.rel target = $region3
    $region8: #{tpu_custom_call.1} parent=1 // loop_exit
      _
    %437 = vsyncpa [#allocation7], 1
    %s438 = scalar_lea.sflag [#allocation7], 1
    %439 = vsyncpa %s438, 1
    %440 = vsyncpa [#allocation10], 1
    %s441 = scalar_lea.sflag [#allocation10], 1
    %442 = vsyncpa %s441, 1
    %443 = vsyncpa [#allocation8], 1
    %s444 = scalar_lea.sflag [#allocation8], 1
    %445 = vsyncpa %s444, 1

</llo_original>
